<compile_context>
chip_gen: v7x
topology: tpu7x:2x2x1
jax: 0.10.0
libtpu: 0.0.40
codegen_flags: <defaults>
</compile_context>

<pallas_src>
import jax
import jax.numpy as jnp
from jax.experimental import pallas as pl
from jax.experimental.pallas import tpu as pltpu


def _swish_kernel(x_ref, o_ref):
    # swish(x) = x * sigmoid(x) = x / (1 + exp(-x)).
    # Computed in f32; exp and the approximate reciprocal both land on the EUP
    # slot, so the VPU only sees a negate/add/mul. (For bf16 inputs on v6e/v7x
    # one could compute natively in bf16, but the op is HBM-bound so the f32
    # path costs nothing and is safe on v5e too.)
    xf = x_ref[...].astype(jnp.float32)
    sig = pl.reciprocal(1.0 + jnp.exp(-xf), approx=True)
    o_ref[...] = (xf * sig).astype(o_ref.dtype)


def _choose_lanes(n: int) -> int:
    # Widest lane dimension (multiple of 128) that divides n exactly.
    for cand in (4096, 2048, 1024, 512, 256):
        if n % cand == 0:
            return cand
    return 128


# ~2 MiB blocks: with input + output each double-buffered (~4x resident) this
# stays well inside the 16 MiB default scoped VMEM on v5e (32 MiB on v6e/v7x),
# while being large enough (>1 MiB) to amortize the ~0.35 us per-grid-step
# overhead and reach ~85%+ of the HBM roofline.
_TARGET_BLOCK_BYTES = 2 * 1024 * 1024


def swish(x: jax.Array) -> jax.Array:
    """Elementwise swish (x * sigmoid(x)) via a Pallas TPU kernel."""
    if not jnp.issubdtype(x.dtype, jnp.floating):
        raise TypeError(f"swish expects a floating dtype, got {x.dtype}")

    orig_shape = x.shape
    dtype = x.dtype
    itemsize = jnp.dtype(dtype).itemsize
    n = x.size
    if n == 0:
        return x

    if n % 128 == 0:
        # Fast path: a free (metadata-only) reshape; no pad / slice HBM passes.
        lanes = _choose_lanes(n)
        rows = n // lanes
        x2d = x.reshape(rows, lanes)
        pad = 0
    else:
        # Ragged fallback: pad the flat view only up to the next multiple of
        # 128. Partial *row* blocks are masked by Pallas, so no padding to the
        # row tile is needed.
        lanes = 128
        rows = pl.cdiv(n, lanes)
        pad = rows * lanes - n
        x2d = jnp.pad(x.reshape(-1), (0, pad)).reshape(rows, lanes)

    # Row tile: multiple of 8 (or the full row extent when rows < 8), sized to
    # ~_TARGET_BLOCK_BYTES, and capped so larger inputs keep >= 2 grid steps
    # (lets v7x shard the "parallel" grid axis across its 2 TensorCores).
    if rows <= 8:
        tile_rows = rows
    else:
        tile_rows = _TARGET_BLOCK_BYTES // (lanes * itemsize)
        if rows >= 16:
            tile_rows = min(tile_rows, rows // 2)
        tile_rows = max(8, (min(tile_rows, rows) // 8) * 8)

    grid = (pl.cdiv(rows, tile_rows),)

    out2d = pl.pallas_call(
        _swish_kernel,
        out_shape=jax.ShapeDtypeStruct((rows, lanes), dtype),
        grid=grid,
        in_specs=[pl.BlockSpec((tile_rows, lanes), lambda i: (i, 0))],
        out_specs=pl.BlockSpec((tile_rows, lanes), lambda i: (i, 0)),
        compiler_params=pltpu.CompilerParams(
            dimension_semantics=("parallel",),
        ),
        cost_estimate=pl.CostEstimate(
            flops=4 * n,
            transcendentals=2 * n,
            bytes_accessed=2 * n * itemsize,
        ),
    )(x2d)

    if pad:
        return out2d.reshape(-1)[:n].reshape(orig_shape)
    return out2d.reshape(orig_shape)


if __name__ == "__main__":
    key = jax.random.PRNGKey(0)
    # NCHW activation consistent with the conv-style model this module lives in.
    x = jax.random.normal(key, (2, 4, 16, 16), dtype=jnp.float32)

    y = jax.jit(swish)(x)
    jax.block_until_ready(y)

    # Sanity check against the pure-JAX reference. Tolerance accommodates the
    # approximate EUP reciprocal used for sigmoid inside the kernel (use
    # approx=False in _swish_kernel for bit-tight results).
    ref = x * jax.nn.sigmoid(x)
    assert y.shape == x.shape and y.dtype == x.dtype
    assert jnp.allclose(y, ref, atol=2e-2, rtol=2e-2), float(
        jnp.max(jnp.abs(y - ref))
    )

    print("KERNEL_OK")
</pallas_src>

<mosaic_0001>
module attributes {stable_mosaic.version = 11 : i64} {
  func.func @_swish_kernel(%arg0: i32, %arg1: memref<1x2048xf32, #tpu.memory_space<vmem>>, %arg2: memref<1x2048xf32, #tpu.memory_space<vmem>>) attributes {dimension_semantics = [#tpu.dimension_semantics<parallel>], iteration_bounds = array<i64: 1>, scalar_prefetch = 0 : i64, scratch_operands = 0 : i64, tpu.core_type = #tpu.core_type<tc>, window_params = [{transform_indices = @transform_0, window_bounds = array<i64: 1, 2048>}, {transform_indices = @transform_1, window_bounds = array<i64: 1, 2048>}]} {
    %c0 = arith.constant 0 : index
    %c0_0 = arith.constant 0 : index
    %0 = vector.load %arg1[%c0, %c0_0] : memref<1x2048xf32, #tpu.memory_space<vmem>>, vector<1x2048xf32>
    %cst = arith.constant 0.000000e+00 : f32
    %1 = vector.broadcast %cst : f32 to vector<1x2048xf32>
    %2 = arith.subf %1, %0 : vector<1x2048xf32>
    %3 = math.exp %2 : vector<1x2048xf32>
    %cst_1 = arith.constant 1.000000e+00 : f32
    %4 = vector.broadcast %cst_1 : f32 to vector<1x2048xf32>
    %5 = arith.addf %4, %3 : vector<1x2048xf32>
    %6 = tpu.reciprocal %5 {approx = true} : vector<1x2048xf32> -> vector<1x2048xf32>
    %7 = arith.mulf %0, %6 : vector<1x2048xf32>
    %c0_2 = arith.constant 0 : index
    %c0_3 = arith.constant 0 : index
    %8 = vector.load %arg2[%c0_2, %c0_3] : memref<1x2048xf32, #tpu.memory_space<vmem>>, vector<1x2048xf32>
    tpu.vector_store %arg2[%c0_2, %c0_3], %7 {strides = array<i32>} : memref<1x2048xf32, #tpu.memory_space<vmem>>, vector<1x2048xf32>,
    return
  }
  func.func @transform_0(%arg0: i32) -> (i32, i32) {
    %c0_i32 = arith.constant 0 : i32
    %c0_i32_0 = arith.constant 0 : i32
    return %arg0, %c0_i32 : i32, i32
  }
  func.func @transform_1(%arg0: i32) -> (i32, i32) {
    %c0_i32 = arith.constant 0 : i32
    %c0_i32_0 = arith.constant 0 : i32
    return %arg0, %c0_i32 : i32, i32
  }
}

</mosaic_0001>

<llo_original>
// kernel: swish.1
$region0: #{swish.1}
  #allocation0 [shape = 'u32[]', space=smem, size = 0x4, offset = 0x4, fixed_abs, tag = 'smem constant byte address 0x4 - core index']
  #allocation1 [shape = 'u32[144,128]{1,0:T(1,128)}', space=vmem, size = 0x12000, scoped, tag = 'internal scratch']
  %s0 = inlined_call_operand.vmem [shape: f32[1,2048], index: 0, kind: input, shape index: {}]
  %s1 = inlined_call_operand.vmem [shape: f32[1,2048], index: 1, kind: output, shape index: {}]
  %s2 = sld [smem:[#allocation0]]
  $region14: #{swish.1} parent=0
    _
  %s4 = ssub.s32 1, %s2
  %s5 = scalar_select 0, %s4, %s2
  // Predicated region
  $region2: #{swish.1} parent=0 // pred_check
    _
  $region3: #{swish.1} parent=0 // pred_check_branch
    %7 = sbr.rel (0) target = $region5
  $region4: #{swish.1} parent=0 // pred_region
    _
  $region5: #{swish.1} parent=0 // pred_fallthru
    _
  %v8 = vld [vmem:[%s0] sm:$0xff]
  %v9 = vld [vmem:[%s0 + $0x8] sm:$0xff]
  %v10 = vsub.f32 0.0, %v8
  %v11 = vsub.f32 0.0, %v9
  %v12 = vmul.f32 %v10, 1.442695
  %v13 = vpow.pop %v12
  %v14 = vmul.f32 %v11, 1.442695
  %v15 = vpow.pop %v14
  %v16 = vadd.f32 %v13, 1.0
  %v17 = vadd.f32 %v15, 1.0
  %v18 = vrcp.pop %v16
  %v19 = vrcp.pop %v17
  %v20 = vmul.f32 %v8, %v18
  %v21 = vmul.f32 %v9, %v19
  %22 = vst [vmem:[%s1] sm:$0xff] %v20
  %23 = vst [vmem:[%s1 + $0x8] sm:$0xff] %v21
  // Predicated region
  $region6: #{swish.1} parent=0 // pred_check
    _
  $region7: #{swish.1} parent=0 // pred_check_branch
    %25 = sbr.rel (0) target = $region9
  $region8: #{swish.1} parent=0 // pred_region
    _
  $region9: #{swish.1} parent=0 // pred_fallthru
    _
  // Predicated region
  $region10: #{swish.1} parent=0 // pred_check
    _
  $region11: #{swish.1} parent=0 // pred_check_branch
    %27 = sbr.rel (0) target = $region13
  $region12: #{swish.1} parent=0 // pred_region
    _
  $region13: #{swish.1} parent=0 // pred_fallthru
    _

</llo_original>
